<compile_context>
chip_gen: v7x
topology: tpu7x:2x2x1
jax: 0.10.0
libtpu: 0.0.40
codegen_flags: <defaults>
</compile_context>

<pallas_src>
import functools

import jax
import jax.numpy as jnp
from jax.experimental import pallas as pl
from jax.experimental.pallas import tpu as pltpu

# Per-input block budget. 2 inputs x 2 pipeline buffers x 4 MiB = 16 MiB,
# which fits v6e/v7x's 32 MiB default scoped VMEM; we raise the scoped limit
# explicitly so v5e (16 MiB default) compiles cleanly as well.
_TARGET_BLOCK_BYTES = 4 * 1024 * 1024
_VMEM_LIMIT_BYTES = 32 * 1024 * 1024
# Max bytes the pipelined input blocks (2 inputs x 2 buffers) may occupy
# before we fall back to the plain-JAX path (headroom for output/scratch).
_MAX_PIPELINE_BYTES = 24 * 1024 * 1024


def _sublane_rows(itemsize):
    """Rows per packed vreg sublane group: f32 -> 8, bf16 -> 16, int8/fp8 -> 32."""
    return max(8, 32 // max(1, itemsize))


def _choose_tile_b(batch, n_classes, itemsize_s, itemsize_t):
    """Rows per batch tile: sized by byte budget, packed-sublane aligned."""
    itemsize = max(itemsize_s, itemsize_t)
    rows_budget = _TARGET_BLOCK_BYTES // max(1, n_classes * itemsize)
    if rows_budget >= batch:
        # Single block covering the whole batch (full-dim block is always legal).
        return batch
    sub = _sublane_rows(min(itemsize_s, itemsize_t))
    return max(sub, (rows_budget // sub) * sub)


def _kd_pair_kernel(fs_ref, ft_ref, out_ref, *, inv_t, batch, tile_b):
    """One batch-tile grid step.

    fs_ref / ft_ref: [tile_b, C] logit blocks.
    out_ref:         [1, 1] PARTIAL sum_j p_t*(log p_t - log p_s) for this tile
                     (leading tile axis squeezed; partials are summed outside).
    """
    bt = pl.program_id(0)

    # Cast per-tile in vregs (bf16 stays in HBM/VMEM -> half the DMA bytes);
    # multiply by 1/T instead of a per-element divide.
    fs = fs_ref[...].astype(jnp.float32) * inv_t
    ft = ft_ref[...].astype(jnp.float32) * inv_t

    # Row-wise stabilized softmax pieces (classes = lane-dense last axis).
    m_s = jnp.max(fs, axis=-1, keepdims=True)
    m_t = jnp.max(ft, axis=-1, keepdims=True)
    z_s = fs - m_s
    z_t = ft - m_t
    e_s = jnp.exp(z_s)
    e_t = jnp.exp(z_t)
    denom_s = jnp.sum(e_s, axis=-1, keepdims=True)        # [tile_b, 1]
    denom_t = jnp.sum(e_t, axis=-1, keepdims=True)        # [tile_b, 1]

    # sum_j p_t (log p_t - log p_s)
    #   = sum_j e_t (z_t - z_s) / denom_t + log(denom_s / denom_t)
    # Only per-row divides/logs hit the EUP (C-fold fewer than forming
    # p_t / log_p_t explicitly); the two logs are fused into one.
    cross = jnp.sum(e_t * (z_t - z_s), axis=-1, keepdims=True)
    kl_row = cross / denom_t + jnp.log(denom_s / denom_t)  # [tile_b, 1]

    # Mask rows beyond the true batch. A ragged last tile reads unspecified
    # data; everything above is strictly per-row, so garbage (even NaN/Inf)
    # never leaks across rows, and jnp.where drops the unselected branch.
    row_id = jax.lax.broadcasted_iota(jnp.int32, kl_row.shape, 0) + bt * tile_b
    kl_row = jnp.where(row_id < batch, kl_row, 0.0)

    out_ref[...] = jnp.sum(kl_row, axis=0, keepdims=True)  # [1, 1] partial sum


def _kd_pair_kl_sum_pallas(fs, ft, temperature, *, tile_b=None):
    """sum_ij p_t * (log p_t - log p_s) for one 2-D pair, via Pallas."""
    batch, n_classes = fs.shape
    if tile_b is None:
        tile_b = _choose_tile_b(batch, n_classes,
                                fs.dtype.itemsize, ft.dtype.itemsize)
    n_bt = pl.cdiv(batch, tile_b)

    kernel = functools.partial(
        _kd_pair_kernel,
        inv_t=1.0 / float(temperature),
        batch=batch,
        tile_b=tile_b,
    )

    # Per-tile partial sums (distinct output block per grid step) -> the
    # batch-tile axis is fully "parallel" and can be sharded across v7x's
    # two TensorCores; the (n_bt,) partials are summed in the wrapper.
    partials = pl.pallas_call(
        kernel,
        out_shape=jax.ShapeDtypeStruct((n_bt, 1, 1), jnp.float32),
        grid_spec=pltpu.PrefetchScalarGridSpec(
            num_scalar_prefetch=0,
            grid=(n_bt,),
            in_specs=[
                pl.BlockSpec((tile_b, n_classes), lambda b: (b, 0)),
                pl.BlockSpec((tile_b, n_classes), lambda b: (b, 0)),
            ],
            out_specs=pl.BlockSpec((None, 1, 1), lambda b: (b, 0, 0)),
        ),
        compiler_params=pltpu.CompilerParams(
            dimension_semantics=("parallel",),
            vmem_limit_bytes=_VMEM_LIMIT_BYTES,
        ),
    )(fs, ft)

    return jnp.sum(partials)


def _kd_pair_kl_sum_jax(fs, ft, temperature):
    """Plain-JAX fallback / fast path for one 2-D pair."""
    fs32 = fs.astype(jnp.float32) / temperature
    ft32 = ft.astype(jnp.float32) / temperature
    log_p_s = jax.nn.log_softmax(fs32, axis=1)
    p_t = jax.nn.softmax(ft32, axis=1)
    log_p_t = jax.nn.log_softmax(ft32, axis=1)
    return jnp.sum(p_t * (log_p_t - log_p_s))


def _use_pallas(fs, ft):
    """Dispatch: kernel only where it wins and fits VMEM."""
    batch, n_classes = fs.shape
    # Tiny / lane-wasting pairs: dominated by launch + per-step overhead, and
    # C < 128 wastes most lanes -> XLA's fused elementwise path is faster.
    if n_classes < 128 or batch * n_classes < 8 * 128:
        return False
    tile_b = _choose_tile_b(batch, n_classes,
                            fs.dtype.itemsize, ft.dtype.itemsize)
    block_bytes = tile_b * n_classes * (fs.dtype.itemsize + ft.dtype.itemsize)
    if 2 * block_bytes > _MAX_PIPELINE_BYTES:
        # TODO(synk): tile the class dim with an online log-sum-exp
        # formulation for vocab-scale C instead of falling back to plain JAX.
        return False
    return True


def kd_loss(feat_s, feat_t, temperature=3):
    """JAX/Pallas equivalent of KD.forward(feat_s, feat_t, epoch_ratio)."""
    loss = jnp.float32(0.0)
    cnt = 0
    t2 = float(temperature) ** 2
    for fs, ft in zip(feat_s, feat_t):
        if fs.ndim == 2 and fs.shape == ft.shape:
            if _use_pallas(fs, ft):
                kl = _kd_pair_kl_sum_pallas(fs, ft, temperature)
            else:
                kl = _kd_pair_kl_sum_jax(fs, ft, temperature)
            loss = loss + kl * (t2 / fs.shape[0])
            cnt += 1
    if cnt == 0:
        raise ValueError("KD loss: no 2-D feature pairs with matching shapes.")
    return loss / cnt


def _reference_kd_loss(feat_s, feat_t, temperature=3):
    """Pure-JAX reference for correctness checking."""
    loss = 0.0
    cnt = 0
    for fs, ft in zip(feat_s, feat_t):
        if fs.ndim == 2 and fs.shape == ft.shape:
            kl = _kd_pair_kl_sum_jax(fs, ft, temperature)
            loss = loss + kl * temperature ** 2 / fs.shape[0]
            cnt += 1
    return loss / cnt


if __name__ == "__main__":
    key = jax.random.PRNGKey(0)
    keys = jax.random.split(key, 12)

    B, C = 2, 32
    feat_s = [
        jax.random.normal(keys[0], (B, C), dtype=jnp.float32),              # tiny: JAX fast path
        jax.random.normal(keys[1], (2, 4, 16, 16), dtype=jnp.float32),      # 4-D: skipped
        jax.random.normal(keys[2], (B, C), dtype=jnp.float32),              # tiny: JAX fast path
        jax.random.normal(keys[3], (20, 128), dtype=jnp.float32),           # kernel path (ragged batch)
        jax.random.normal(keys[4], (16, 256), dtype=jnp.bfloat16),          # kernel path, bf16
    ]
    feat_t = [
        jax.random.normal(keys[5], (B, C), dtype=jnp.float32),
        jax.random.normal(keys[6], (2, 4, 16, 16), dtype=jnp.float32),
        jax.random.normal(keys[7], (B, C), dtype=jnp.float32),
        jax.random.normal(keys[8], (20, 128), dtype=jnp.float32),
        jax.random.normal(keys[9], (16, 256), dtype=jnp.bfloat16),
    ]

    out = kd_loss(feat_s, feat_t, temperature=3)
    out = jax.block_until_ready(out)

    ref = _reference_kd_loss(feat_s, feat_t, temperature=3)
    assert jnp.allclose(out, ref, rtol=1e-4, atol=1e-5), (out, ref)

    # Extra check: force the multi-tile + ragged-last-tile kernel path
    # (tile_b=8 over batch=20 -> 3 tiles, last one masked).
    fs_r = jax.random.normal(keys[10], (20, 128), dtype=jnp.float32)
    ft_r = jax.random.normal(keys[11], (20, 128), dtype=jnp.float32)
    kl_k = jax.block_until_ready(_kd_pair_kl_sum_pallas(fs_r, ft_r, 3.0, tile_b=8))
    kl_j = _kd_pair_kl_sum_jax(fs_r, ft_r, 3.0)
    assert jnp.allclose(kl_k, kl_j, rtol=1e-4, atol=1e-5), (kl_k, kl_j)

    print("KERNEL_OK")
</pallas_src>

<mosaic_0001>
module attributes {stable_mosaic.version = 11 : i64} {
  func.func @_kd_pair_kernel(%arg0: i32, %arg1: memref<20x128xf32, #tpu.memory_space<vmem>>, %arg2: memref<20x128xf32, #tpu.memory_space<vmem>>, %arg3: memref<1x1x1xf32, #tpu.memory_space<vmem>>) attributes {dimension_semantics = [#tpu.dimension_semantics<parallel>], iteration_bounds = array<i64: 1>, scalar_prefetch = 0 : i64, scratch_operands = 0 : i64, tpu.core_type = #tpu.core_type<tc>, window_params = [{transform_indices = @transform_0, window_bounds = array<i64: 20, 128>}, {transform_indices = @transform_1, window_bounds = array<i64: 20, 128>}, {transform_indices = @transform_2, window_bounds = array<i64: 1, 1, 1>}]} {
    %c0 = arith.constant 0 : index
    %c0_0 = arith.constant 0 : index
    %0 = vector.load %arg1[%c0, %c0_0] : memref<20x128xf32, #tpu.memory_space<vmem>>, vector<20x128xf32>
    %cst = arith.constant 0.333333343 : f32
    %1 = vector.broadcast %cst : f32 to vector<20x128xf32>
    %2 = arith.mulf %0, %1 : vector<20x128xf32>
    %c0_1 = arith.constant 0 : index
    %c0_2 = arith.constant 0 : index
    %3 = vector.load %arg2[%c0_1, %c0_2] : memref<20x128xf32, #tpu.memory_space<vmem>>, vector<20x128xf32>
    %cst_3 = arith.constant 0.333333343 : f32
    %4 = vector.broadcast %cst_3 : f32 to vector<20x128xf32>
    %5 = arith.mulf %3, %4 : vector<20x128xf32>
    %cst_4 = arith.constant dense<0xFF800000> : vector<20xf32>
    %6 = vector.multi_reduction <maximumf>, %2, %cst_4 [1] : vector<20x128xf32> to vector<20xf32>
    %7 = vector.shape_cast %6 : vector<20xf32> to vector<20x1xf32>
    %cst_5 = arith.constant dense<0xFF800000> : vector<20xf32>
    %8 = vector.multi_reduction <maximumf>, %5, %cst_5 [1] : vector<20x128xf32> to vector<20xf32>
    %9 = vector.shape_cast %8 : vector<20xf32> to vector<20x1xf32>
    %10 = vector.broadcast %7 : vector<20x1xf32> to vector<20x128xf32>
    %11 = arith.subf %2, %10 : vector<20x128xf32>
    %12 = vector.broadcast %9 : vector<20x1xf32> to vector<20x128xf32>
    %13 = arith.subf %5, %12 : vector<20x128xf32>
    %14 = math.exp %11 : vector<20x128xf32>
    %15 = math.exp %13 : vector<20x128xf32>
    %cst_6 = arith.constant dense<0.000000e+00> : vector<20xf32>
    %16 = vector.multi_reduction <add>, %14, %cst_6 [1] : vector<20x128xf32> to vector<20xf32>
    %17 = vector.shape_cast %16 : vector<20xf32> to vector<20x1xf32>
    %cst_7 = arith.constant dense<0.000000e+00> : vector<20xf32>
    %18 = vector.multi_reduction <add>, %15, %cst_7 [1] : vector<20x128xf32> to vector<20xf32>
    %19 = vector.shape_cast %18 : vector<20xf32> to vector<20x1xf32>
    %20 = arith.subf %13, %11 : vector<20x128xf32>
    %21 = arith.mulf %15, %20 : vector<20x128xf32>
    %cst_8 = arith.constant dense<0.000000e+00> : vector<20xf32>
    %22 = vector.multi_reduction <add>, %21, %cst_8 [1] : vector<20x128xf32> to vector<20xf32>
    %23 = vector.shape_cast %22 : vector<20xf32> to vector<20x1xf32>
    %24 = arith.divf %23, %19 : vector<20x1xf32>
    %25 = arith.divf %17, %19 : vector<20x1xf32>
    %26 = math.log %25 : vector<20x1xf32>
    %27 = arith.addf %24, %26 : vector<20x1xf32>
    %28 = tpu.iota {dimensions = array<i32: 0>} : vector<20x1xi32>
    %c20_i32 = arith.constant 20 : i32
    %29 = arith.muli %arg0, %c20_i32 : i32
    %30 = vector.broadcast %29 : i32 to vector<20x1xi32>
    %31 = arith.addi %28, %30 : vector<20x1xi32>
    %c20_i32_9 = arith.constant 20 : i32
    %32 = vector.broadcast %c20_i32_9 : i32 to vector<20x1xi32>
    %33 = arith.cmpi slt, %31, %32 : vector<20x1xi32>
    %cst_10 = arith.constant 0.000000e+00 : f32
    %34 = vector.broadcast %cst_10 : f32 to vector<20x1xf32>
    %35 = arith.select %33, %27, %34 : vector<20x1xi1>, vector<20x1xf32>
    %cst_11 = arith.constant dense<0.000000e+00> : vector<1xf32>
    %36 = vector.multi_reduction <add>, %35, %cst_11 [0] : vector<20x1xf32> to vector<1xf32>
    %37 = vector.shape_cast %36 : vector<1xf32> to vector<1x1xf32>
    %c0_12 = arith.constant 0 : index
    %c0_13 = arith.constant 0 : index
    %c0_14 = arith.constant 0 : index
    %38 = vector.load %arg3[%c0_12, %c0_13, %c0_14] : memref<1x1x1xf32, #tpu.memory_space<vmem>>, vector<1x1x1xf32>
    %39 = vector.shape_cast %38 : vector<1x1x1xf32> to vector<1x1xf32>
    %40 = vector.shape_cast %37 : vector<1x1xf32> to vector<1x1x1xf32>
    tpu.vector_store %arg3[%c0_12, %c0_13, %c0_14], %40 {strides = array<i32>} : memref<1x1x1xf32, #tpu.memory_space<vmem>>, vector<1x1x1xf32>,
    return
  }
  func.func @transform_0(%arg0: i32) -> (i32, i32) {
    %c0_i32 = arith.constant 0 : i32
    %c0_i32_0 = arith.constant 0 : i32
    return %arg0, %c0_i32 : i32, i32
  }
  func.func @transform_1(%arg0: i32) -> (i32, i32) {
    %c0_i32 = arith.constant 0 : i32
    %c0_i32_0 = arith.constant 0 : i32
    return %arg0, %c0_i32 : i32, i32
  }
  func.func @transform_2(%arg0: i32) -> (i32, i32, i32) {
    %c0_i32 = arith.constant 0 : i32
    %c0_i32_0 = arith.constant 0 : i32
    %c0_i32_1 = arith.constant 0 : i32
    return %arg0, %c0_i32, %c0_i32_0 : i32, i32, i32
  }
}

</mosaic_0001>

<llo_original>
// kernel: tpu_custom_call.1
$region0: #{tpu_custom_call.1}
  #allocation0 [shape = 'u32[]', space=smem, size = 0x4, offset = 0x4, fixed_abs, tag = 'smem constant byte address 0x4 - core index']
  #allocation1 [shape = 'u32[144,128]{1,0:T(1,128)}', space=vmem, size = 0x12000, scoped, tag = 'internal scratch']
  %s0 = inlined_call_operand.hbm [shape: f32[20,128], index: 0, kind: input, shape index: {}]
  %s1 = inlined_call_operand.hbm [shape: f32[20,128], index: 1, kind: input, shape index: {}]
  %s2 = inlined_call_operand.hbm [shape: f32[1,1,1], index: 2, kind: output, shape index: {}]
  %s3 = sld [smem:[#allocation0]]
  $region26: #{tpu_custom_call.1} parent=0
    _
  %s5 = ssub.s32 1, %s3
  %s6 = scalar_select 0, %s5, %s3
  $region1: #{tpu_custom_call.1} parent=0
    #allocation2 [shape = 'u8[12288]{0}', space=vmem, size = 0x3000, scoped, tag = 'input window, operand 0, single buffered']
    #allocation3 [shape = 's32[1]{0}', space=sflag, size = 0x4, scoped, tag = 'scoped memory for tpu_custom_call.1']
    #allocation4 [shape = 's32[1]{0}', space=sflag, size = 0x4, scoped, tag = 'scoped memory for tpu_custom_call.1']
    #allocation5 [shape = 'u8[12288]{0}', space=vmem, size = 0x3000, scoped, tag = 'input window, operand 1, single buffered']
    #allocation6 [shape = 's32[1]{0}', space=sflag, size = 0x4, scoped, tag = 'scoped memory for tpu_custom_call.1']
    #allocation7 [shape = 'u8[512]{0}', space=vmem, size = 0x400, scoped, tag = 'output window, operand 0, single buffered']
    %7 = vsyncpa [#allocation3], 0
    %8 = vsyncpa [#allocation6], 0
    %9 = vsyncpa [#allocation4], 0
    // Predicated region
    $region2: #{tpu_custom_call.1} parent=1 // pred_check
      _
    $region3: #{tpu_custom_call.1} parent=1 // pred_check_branch
      %11 = sbr.rel (0) target = $region5
    $region4: #{tpu_custom_call.1} parent=1 // pred_region
      %s13 = ssub.s32 384, 384
      %14 = vsyncadd [#allocation3], %s13
      %s15 = sshll.u32 [#allocation2], 4
      %s16 = int_to_ptr.vmem [resolvable:$true] %s15
      %21 = dma.hbm_to_vmem [thread:$0]  %s0, 384, %s16, [#allocation3], 128, 128, 8
    $region5: #{tpu_custom_call.1} parent=1 // pred_fallthru
      _
    // Predicated region
    $region6: #{tpu_custom_call.1} parent=1 // pred_check
      _
    $region7: #{tpu_custom_call.1} parent=1 // pred_check_branch
      %23 = sbr.rel (0) target = $region9
    $region8: #{tpu_custom_call.1} parent=1 // pred_region
      %s25 = ssub.s32 384, 384
      %26 = vsyncadd [#allocation6], %s25
      %s27 = sshll.u32 [#allocation5], 4
      %s28 = int_to_ptr.vmem [resolvable:$true] %s27
      %33 = dma.hbm_to_vmem [thread:$0]  %s1, 384, %s28, [#allocation6], 128, 128, 8
    $region9: #{tpu_custom_call.1} parent=1 // pred_fallthru
      _
    // Predicated region
    $region10: #{tpu_custom_call.1} parent=1 // pred_check
      _
    $region11: #{tpu_custom_call.1} parent=1 // pred_check_branch
      %35 = sbr.rel (0) target = $region13
    $region12: #{tpu_custom_call.1} parent=1 // pred_region
      %36 = dma.done [#allocation3], 384
    $region13: #{tpu_custom_call.1} parent=1 // pred_fallthru
      _
    // Predicated region
    $region14: #{tpu_custom_call.1} parent=1 // pred_check
      _
    $region15: #{tpu_custom_call.1} parent=1 // pred_check_branch
      %38 = sbr.rel (0) target = $region17
    $region16: #{tpu_custom_call.1} parent=1 // pred_region
      %39 = dma.done [#allocation6], 384
    $region17: #{tpu_custom_call.1} parent=1 // pred_fallthru
      _
    %v40 = vld [vmem:[#allocation2] sm:$0xff]
    %v41 = vld [vmem:[#allocation2 + $0x8] sm:$0xff]
    %v42 = vld [vmem:[#allocation2 + $0x10] sm:$0xf]
    %v43 = vmul.f32 %v40, 0.33333334
    %v44 = vmul.f32 %v41, 0.33333334
    %v45 = vmul.f32 %v42, 0.33333334
    %v46 = vld [vmem:[#allocation5] sm:$0xff]
    %v47 = vld [vmem:[#allocation5 + $0x8] sm:$0xff]
    %v48 = vld [vmem:[#allocation5 + $0x10] sm:$0xf]
    %v49 = vmul.f32 %v46, 0.33333334
    %v50 = vmul.f32 %v47, 0.33333334
    %v51 = vmul.f32 %v48, 0.33333334
    %52 = vmax.xlane.f32.xlu0 %v43
    %v53 = vpop.xlane.xlu0 %52
    %54 = vmax.xlane.f32.xlu0 %v44
    %v55 = vpop.xlane.xlu0 %54
    %vm56 = vcmask 1043456
    %v57 = vsel %vm56, %v45, -inf
    %58 = vmax.xlane.f32.xlu0 %v57
    %v59 = vpop.xlane.xlu0 %58
    %60 = vmax.xlane.f32.xlu0 %v49
    %v61 = vpop.xlane.xlu0 %60
    %62 = vmax.xlane.f32.xlu0 %v50
    %v63 = vpop.xlane.xlu0 %62
    %v64 = vsel %vm56, %v51, -inf
    %65 = vmax.xlane.f32.xlu0 %v64
    %v66 = vpop.xlane.xlu0 %65
    %v67 = vsub.f32 %v43, %v53
    %v68 = vsub.f32 %v44, %v55
    %v69 = vsub.f32 %v45, %v59
    %v70 = vsub.f32 %v49, %v61
    %v71 = vsub.f32 %v50, %v63
    %v72 = vsub.f32 %v51, %v66
    %v73 = vmul.f32 %v67, 1.442695
    %v74 = vpow.pop %v73
    %v75 = vmul.f32 %v68, 1.442695
    %v76 = vpow.pop %v75
    %v77 = vmul.f32 %v69, 1.442695
    %v78 = vpow.pop %v77
    %v79 = vmul.f32 %v70, 1.442695
    %v80 = vpow.pop %v79
    %v81 = vmul.f32 %v71, 1.442695
    %v82 = vpow.pop %v81
    %v83 = vmul.f32 %v72, 1.442695
    %v84 = vpow.pop %v83
    %85 = vadd.xlane.f32.xlu0 %v74
    %v86 = vpop.xlane.xlu0 %85
    %87 = vadd.xlane.f32.xlu0 %v76
    %v88 = vpop.xlane.xlu0 %87
    %v89 = vsel %vm56, %v78, 0.0
    %90 = vadd.xlane.f32.xlu0 %v89
    %v91 = vpop.xlane.xlu0 %90
    %92 = vadd.xlane.f32.xlu0 %v80
    %v93 = vpop.xlane.xlu0 %92
    %94 = vadd.xlane.f32.xlu0 %v82
    %v95 = vpop.xlane.xlu0 %94
    %v96 = vsel %vm56, %v84, 0.0
    %97 = vadd.xlane.f32.xlu0 %v96
    %v98 = vpop.xlane.xlu0 %97
    %v99 = vsub.f32 %v70, %v67
    %v100 = vsub.f32 %v71, %v68
    %v101 = vsub.f32 %v72, %v69
    %v102 = vmul.f32 %v80, %v99
    %v103 = vmul.f32 %v82, %v100
    %v104 = vmul.f32 %v84, %v101
    %105 = vadd.xlane.f32.xlu0 %v102
    %v106 = vpop.xlane.xlu0 %105
    %107 = vadd.xlane.f32.xlu0 %v103
    %v108 = vpop.xlane.xlu0 %107
    %v109 = vsel %vm56, %v104, 0.0
    %110 = vadd.xlane.f32.xlu0 %v109
    %v111 = vpop.xlane.xlu0 %110
    %v112 = vrcp.pop %v93
    %v113 = vmul.f32 %v106, %v112
    %v114 = vrcp.pop %v95
    %v115 = vmul.f32 %v108, %v114
    %v116 = vrcp.pop %v98
    %v117 = vmul.f32 %v111, %v116
    %v118 = vmul.f32 %v86, %v112
    %v119 = vmul.f32 %v88, %v114
    %v120 = vmul.f32 %v91, %v116
    %v121 = vlog2.pop %v118
    %v122 = vmul.f32 %v121, 0.6931472
    %v123 = vlog2.pop %v119
    %v124 = vmul.f32 %v123, 0.6931472
    %v125 = vlog2.pop %v120
    %v126 = vmul.f32 %v125, 0.6931472
    %v127 = vadd.f32 %v113, %v122
    %v128 = vadd.f32 %v115, %v124
    %v129 = vadd.f32 %v117, %v126
    %v130 = vlaneseq
    %v131 = vshrl.u32 %v130, 7
    %v132 = vadd.s32 %v131, 8
    %v133 = vadd.s32 %v131, 16
    %s134 = smul.u32 0, 20
    %v135 = vstv %s134
    %v136 = vadd.s32 %v131, %v135
    %v137 = vadd.s32 %v132, %v135
    %v138 = vadd.s32 %v133, %v135
    %vm139 = vcmp.lt.s32.totalorder %v136, 20
    %vm140 = vcmp.lt.s32.totalorder %v137, 20
    %vm141 = vcmp.lt.s32.totalorder %v138, 20
    %v142 = vsel %vm139, %v127, 0.0
    %v143 = vsel %vm140, %v128, 0.0
    %v144 = vsel %vm141, %v129, 0.0
    %v145 = vadd.f32 %v142, %v143
    %v146 = vsel %vm56, %v144, 0.0
    %v147 = vadd.f32 %v145, %v146
    %v148 = vrot.slane %v147, 4
    %v149 = vadd.f32 %v147, %v148
    %v150 = vrot.slane %v149, 2
    %v151 = vadd.f32 %v149, %v150
    %v152 = vrot.slane %v151, 1
    %v153 = vadd.f32 %v151, %v152
    %vm154 = vcmask 0
    %155 = vst.msk [vmem:[#allocation7] sm:$0x1] %vm154, %v153
    // Predicated region
    $region18: #{tpu_custom_call.1} parent=1 // pred_check
      _
    $region19: #{tpu_custom_call.1} parent=1 // pred_check_branch
      %157 = sbr.rel (0) target = $region21
    $region20: #{tpu_custom_call.1} parent=1 // pred_region
      %s159 = ssub.s32 16, 16
      %160 = vsyncadd [#allocation4], %s159
      %s162 = sshll.u32 [#allocation7], 4
      %s163 = int_to_ptr.vmem [resolvable:$true] %s162
      %165 = dma.vmem_to_hbm [thread:$0]  %s163, 16, %s2, [#allocation4]
    $region21: #{tpu_custom_call.1} parent=1 // pred_fallthru
      _
    // Predicated region
    $region22: #{tpu_custom_call.1} parent=1 // pred_check
      _
    $region23: #{tpu_custom_call.1} parent=1 // pred_check_branch
      %167 = sbr.rel (0) target = $region25
    $region24: #{tpu_custom_call.1} parent=1 // pred_region
      %168 = dma.done [#allocation4], 16
    $region25: #{tpu_custom_call.1} parent=1 // pred_fallthru
      _
    %169 = vsyncpa [#allocation3], 1
    %170 = vsyncpa [#allocation6], 1
    %171 = vsyncpa [#allocation4], 1

</llo_original>
